<compile_context>
chip_gen: v7x
topology: tpu7x:2x2x1
jax: 0.10.0
libtpu: 0.0.40
codegen_flags: <defaults>
</compile_context>

<pallas_src>
import functools
import math

import jax
import jax.numpy as jnp
from jax.experimental import pallas as pl
from jax.experimental.pallas import tpu as pltpu


def _conv_lrelu_kernel(x_ref, w_ref, b_ref, o_ref, acc_ref, *, kh_size, tile_rows,
                       negative_slope):
    """One (batch, row-tile) grid step.

    x_ref   : (1, 1, TH + KH - 1, Wp*Cin)  lane-packed padded input rows (+halo)
    w_ref   : (KH, Wp*Cin, W_out*Cout)     block-Toeplitz weights (VMEM resident)
    b_ref   : (1, W_out*Cout)              bias tiled along the packed width
    o_ref   : (1, TH, W_out*Cout)          lane-packed output rows
    acc_ref : (TH, W_out*Cout) f32         explicit VMEM accumulator scratch
    """
    # Bias folded into the accumulator init (one sublane broadcast per tile).
    acc_ref[...] = jnp.broadcast_to(b_ref[...], acc_ref.shape).astype(jnp.float32)

    # One MXU contraction per kh tap: K = Wp*Cin, N = W_out*Cout.  The LHS is a
    # plain static (Python-loop) row window of the input block — no reshape
    # copies, f32 accumulation via preferred_element_type.
    for kh in range(kh_size):
        lhs = x_ref[0, 0, kh:kh + tile_rows, :]               # (TH, Wp*Cin)
        acc_ref[...] += jnp.dot(lhs, w_ref[kh],
                                preferred_element_type=jnp.float32)

    y = acc_ref[...]
    y = jnp.where(y >= 0, y, negative_slope * y)              # LeakyReLU(0.2)
    o_ref[...] = y.reshape(o_ref.shape).astype(o_ref.dtype)   # lane-dense store


def _pick_row_tile(h_out, batch, max_tile=256):
    """Largest row tile (multiple of 8, dividing h_out) that still gives the
    pipeline / megacore at least ~4 grid steps."""
    divisors = [t for t in range(8, min(h_out, max_tile) + 1, 8) if h_out % t == 0]
    if not divisors:
        return h_out                      # block == full dim is always legal
    for t in reversed(divisors):
        if (h_out // t) * batch >= 4:
            return t
    return divisors[-1]


def block_forward(x_nchw, weight, bias, *, padding=1, negative_slope=0.2):
    """Forward pass of `Block` (conv3x3 stride=1 dilation=1 + LeakyReLU).

    x_nchw : (B, Cin, H, W)        float32 (PyTorch NCHW)
    weight : (Cout, Cin, KH, KW)   float32 (PyTorch OIHW)
    bias   : (Cout,)               float32
    returns: (B, Cout, H_out, W_out)
    """
    B, Cin, H, W = x_nchw.shape
    Cout, _, KH, KW = weight.shape

    Hp, Wp = H + 2 * padding, W + 2 * padding
    H_out, W_out = Hp - KH + 1, Wp - KW + 1
    WpCin, WCout = Wp * Cin, W_out * Cout

    # ---- layout: NCHW -> lane-packed padded NHWC ---------------------------
    x_nhwc = jnp.transpose(x_nchw, (0, 2, 3, 1))
    x_pad = jnp.pad(x_nhwc, ((0, 0), (padding, padding), (padding, padding), (0, 0)))
    x_packed = x_pad.reshape(B, Hp, WpCin)

    # ---- row tiling with KH-1 halo rows ------------------------------------
    TH = _pick_row_tile(H_out, B)
    n_tiles = H_out // TH
    THp = TH + KH - 1
    if n_tiles == 1:
        x_tiles = x_packed[:, None, :, :]             # (B, 1, Hp, Wp*Cin), no gather
    else:
        row_idx = jnp.arange(n_tiles)[:, None] * TH + jnp.arange(THp)[None, :]
        x_tiles = x_packed[:, row_idx, :]             # (B, n_tiles, THp, Wp*Cin)

    # ---- block-Toeplitz weights: (KH, Wp*Cin, W_out*Cout) -------------------
    # BW[kh][wp*Cin+ci, w*Cout+co] = W[kh, wp-w, ci, co] if 0 <= wp-w < KW else 0
    w_hwio = jnp.transpose(weight, (2, 3, 1, 0))      # (KH, KW, Cin, Cout)
    wp_i = jnp.arange(Wp)
    w_i = jnp.arange(W_out)
    kw_rel = wp_i[:, None] - w_i[None, :]             # (Wp, W_out)
    valid = (kw_rel >= 0) & (kw_rel < KW)
    kw_cl = jnp.clip(kw_rel, 0, KW - 1)
    big = w_hwio[:, kw_cl]                            # (KH, Wp, W_out, Cin, Cout)
    big = big * valid[None, :, :, None, None].astype(w_hwio.dtype)
    w_big = big.transpose(0, 1, 3, 2, 4).reshape(KH, WpCin, WCout)

    b_packed = jnp.tile(bias, W_out).reshape(1, WCout)

    # ---- explicit scoped-VMEM budget (double-buffered blocks + weights) -----
    x_item = jnp.dtype(x_nchw.dtype).itemsize
    w_item = jnp.dtype(weight.dtype).itemsize
    vmem_need = (2 * THp * WpCin * x_item          # input blocks (double buffered)
                 + 2 * TH * WCout * x_item         # output blocks
                 + KH * WpCin * WCout * w_item     # resident Toeplitz weights
                 + WCout * 4                       # bias
                 + TH * WCout * 4)                 # accumulator scratch
    vmem_limit = int(min(max(4 * vmem_need, 16 * 2 ** 20), 48 * 2 ** 20))

    kernel = functools.partial(
        _conv_lrelu_kernel,
        kh_size=KH,
        tile_rows=TH,
        negative_slope=negative_slope,
    )

    out_packed = pl.pallas_call(
        kernel,
        out_shape=jax.ShapeDtypeStruct((B, H_out, WCout), x_nchw.dtype),
        grid_spec=pltpu.PrefetchScalarGridSpec(
            num_scalar_prefetch=0,
            grid=(B, n_tiles),
            in_specs=[
                pl.BlockSpec((1, 1, THp, WpCin), lambda b, t: (b, t, 0, 0)),
                pl.BlockSpec((KH, WpCin, WCout), lambda b, t: (0, 0, 0)),
                pl.BlockSpec((1, WCout), lambda b, t: (0, 0)),
            ],
            out_specs=pl.BlockSpec((1, TH, WCout), lambda b, t: (b, t, 0)),
            scratch_shapes=[pltpu.VMEM((TH, WCout), jnp.float32)],
        ),
        compiler_params=pltpu.CompilerParams(
            dimension_semantics=("parallel", "parallel"),
            vmem_limit_bytes=vmem_limit,
        ),
    )(x_tiles, w_big, b_packed)

    # packed -> NCHW to match the PyTorch module's output convention.
    out_nhwc = out_packed.reshape(B, H_out, W_out, Cout)
    return jnp.transpose(out_nhwc, (0, 3, 1, 2))


def _reference_forward(x_nchw, weight, bias, *, padding=1, negative_slope=0.2):
    """Pure-JAX reference (XLA conv) for correctness checking."""
    y = jax.lax.conv_general_dilated(
        x_nchw,
        weight,
        window_strides=(1, 1),
        padding=[(padding, padding), (padding, padding)],
        dimension_numbers=("NCHW", "OIHW", "NCHW"),
    )
    y = y + bias.reshape(1, -1, 1, 1)
    return jnp.where(y >= 0, y, negative_slope * y)


if __name__ == "__main__":
    # Small deterministic example consistent with the module's forward.
    B, Cin, Cout, H, W, K = 2, 4, 8, 16, 16, 3

    key = jax.random.PRNGKey(0)
    kx, kw, kb = jax.random.split(key, 3)

    x = jax.random.normal(kx, (B, Cin, H, W), dtype=jnp.float32)
    fan_in = Cin * K * K
    bound = 1.0 / math.sqrt(fan_in)
    weight = jax.random.uniform(kw, (Cout, Cin, K, K), jnp.float32, -bound, bound)
    bias = jax.random.uniform(kb, (Cout,), jnp.float32, -bound, bound)

    # TODO(synk): conv_type='deconv', stride!=1, dilation!=1, norm_layer and the
    # relu/sigmoid/tanh activation branches of Block are not exercised by the
    # default config and are not implemented in the Pallas kernel.

    fwd = jax.jit(block_forward)
    out = jax.block_until_ready(fwd(x, weight, bias))

    ref = _reference_forward(x, weight, bias)
    assert out.shape == (B, Cout, H, W), out.shape
    assert jnp.allclose(out, ref, atol=1e-3, rtol=1e-3), float(jnp.max(jnp.abs(out - ref)))

    print("KERNEL_OK")
</pallas_src>

<mosaic_0001>
module attributes {stable_mosaic.version = 11 : i64} {
  func.func @_conv_lrelu_kernel(%arg0: i32, %arg1: i32, %arg2: memref<1x1x10x72xf32, #tpu.memory_space<vmem>>, %arg3: memref<3x72x128xf32, #tpu.memory_space<vmem>>, %arg4: memref<1x128xf32, #tpu.memory_space<vmem>>, %arg5: memref<1x8x128xf32, #tpu.memory_space<vmem>>, %arg6: memref<8x128xf32, #tpu.memory_space<vmem>>) attributes {dimension_semantics = [#tpu.dimension_semantics<parallel>, #tpu.dimension_semantics<parallel>], iteration_bounds = array<i64: 2, 2>, scalar_prefetch = 0 : i64, scratch_operands = 1 : i64, tpu.core_type = #tpu.core_type<tc>, window_params = [{transform_indices = @transform_0, window_bounds = array<i64: 1, 1, 10, 72>}, {pipeline_mode = #tpu.pipeline_mode<synchronous>, transform_indices = @transform_1, window_bounds = array<i64: 3, 72, 128>}, {pipeline_mode = #tpu.pipeline_mode<synchronous>, transform_indices = @transform_2, window_bounds = array<i64: 1, 128>}, {transform_indices = @transform_3, window_bounds = array<i64: 1, 8, 128>}]} {
    %c0 = arith.constant 0 : index
    %c0_0 = arith.constant 0 : index
    %0 = vector.load %arg4[%c0, %c0_0] : memref<1x128xf32, #tpu.memory_space<vmem>>, vector<1x128xf32>
    %1 = vector.shape_cast %0 : vector<1x128xf32> to vector<1x128xf32>
    %2 = vector.broadcast %1 : vector<1x128xf32> to vector<8x128xf32>
    %c0_1 = arith.constant 0 : index
    %c0_2 = arith.constant 0 : index
    %3 = vector.load %arg6[%c0_1, %c0_2] : memref<8x128xf32, #tpu.memory_space<vmem>>, vector<8x128xf32>
    tpu.vector_store %arg6[%c0_1, %c0_2], %2 {strides = array<i32>} : memref<8x128xf32, #tpu.memory_space<vmem>>, vector<8x128xf32>,
    %c0_3 = arith.constant 0 : index
    %c0_4 = arith.constant 0 : index
    %c0_5 = arith.constant 0 : index
    %c0_6 = arith.constant 0 : index
    %4 = vector.load %arg2[%c0_3, %c0_4, %c0_5, %c0_6] : memref<1x1x10x72xf32, #tpu.memory_space<vmem>>, vector<1x1x8x72xf32>
    %5 = vector.shape_cast %4 : vector<1x1x8x72xf32> to vector<8x72xf32>
    %c0_7 = arith.constant 0 : index
    %c0_8 = arith.constant 0 : index
    %6 = vector.load %arg6[%c0_7, %c0_8] : memref<8x128xf32, #tpu.memory_space<vmem>>, vector<8x128xf32>
    %c0_9 = arith.constant 0 : index
    %c0_10 = arith.constant 0 : index
    %c0_11 = arith.constant 0 : index
    %7 = vector.load %arg3[%c0_9, %c0_10, %c0_11] : memref<3x72x128xf32, #tpu.memory_space<vmem>>, vector<1x72x128xf32>
    %8 = vector.shape_cast %7 : vector<1x72x128xf32> to vector<72x128xf32>
    %cst = arith.constant dense<0.000000e+00> : vector<8x128xf32>
    %9 = tpu.matmul %5, %8, %cst {dimension_numbers = #tpu.dot_dimension_numbers<[1], [0], [0], [1], [0, 0, 1, 1], [], []>} : vector<8x72xf32>, vector<72x128xf32>, vector<8x128xf32> -> vector<8x128xf32>
    %10 = arith.addf %6, %9 : vector<8x128xf32>
    %c0_12 = arith.constant 0 : index
    %c0_13 = arith.constant 0 : index
    %11 = vector.load %arg6[%c0_12, %c0_13] : memref<8x128xf32, #tpu.memory_space<vmem>>, vector<8x128xf32>
    tpu.vector_store %arg6[%c0_12, %c0_13], %10 {strides = array<i32>} : memref<8x128xf32, #tpu.memory_space<vmem>>, vector<8x128xf32>,
    %c0_14 = arith.constant 0 : index
    %c0_15 = arith.constant 0 : index
    %c1 = arith.constant 1 : index
    %c0_16 = arith.constant 0 : index
    %12 = vector.load %arg2[%c0_14, %c0_15, %c1, %c0_16] : memref<1x1x10x72xf32, #tpu.memory_space<vmem>>, vector<1x1x8x72xf32>
    %13 = vector.shape_cast %12 : vector<1x1x8x72xf32> to vector<8x72xf32>
    %c0_17 = arith.constant 0 : index
    %c0_18 = arith.constant 0 : index
    %14 = vector.load %arg6[%c0_17, %c0_18] : memref<8x128xf32, #tpu.memory_space<vmem>>, vector<8x128xf32>
    %c1_19 = arith.constant 1 : index
    %c0_20 = arith.constant 0 : index
    %c0_21 = arith.constant 0 : index
    %15 = vector.load %arg3[%c1_19, %c0_20, %c0_21] : memref<3x72x128xf32, #tpu.memory_space<vmem>>, vector<1x72x128xf32>
    %16 = vector.shape_cast %15 : vector<1x72x128xf32> to vector<72x128xf32>
    %cst_22 = arith.constant dense<0.000000e+00> : vector<8x128xf32>
    %17 = tpu.matmul %13, %16, %cst_22 {dimension_numbers = #tpu.dot_dimension_numbers<[1], [0], [0], [1], [0, 0, 1, 1], [], []>} : vector<8x72xf32>, vector<72x128xf32>, vector<8x128xf32> -> vector<8x128xf32>
    %18 = arith.addf %14, %17 : vector<8x128xf32>
    %c0_23 = arith.constant 0 : index
    %c0_24 = arith.constant 0 : index
    %19 = vector.load %arg6[%c0_23, %c0_24] : memref<8x128xf32, #tpu.memory_space<vmem>>, vector<8x128xf32>
    tpu.vector_store %arg6[%c0_23, %c0_24], %18 {strides = array<i32>} : memref<8x128xf32, #tpu.memory_space<vmem>>, vector<8x128xf32>,
    %c0_25 = arith.constant 0 : index
    %c0_26 = arith.constant 0 : index
    %c2 = arith.constant 2 : index
    %c0_27 = arith.constant 0 : index
    %20 = vector.load %arg2[%c0_25, %c0_26, %c2, %c0_27] : memref<1x1x10x72xf32, #tpu.memory_space<vmem>>, vector<1x1x8x72xf32>
    %21 = vector.shape_cast %20 : vector<1x1x8x72xf32> to vector<8x72xf32>
    %c0_28 = arith.constant 0 : index
    %c0_29 = arith.constant 0 : index
    %22 = vector.load %arg6[%c0_28, %c0_29] : memref<8x128xf32, #tpu.memory_space<vmem>>, vector<8x128xf32>
    %c2_30 = arith.constant 2 : index
    %c0_31 = arith.constant 0 : index
    %c0_32 = arith.constant 0 : index
    %23 = vector.load %arg3[%c2_30, %c0_31, %c0_32] : memref<3x72x128xf32, #tpu.memory_space<vmem>>, vector<1x72x128xf32>
    %24 = vector.shape_cast %23 : vector<1x72x128xf32> to vector<72x128xf32>
    %cst_33 = arith.constant dense<0.000000e+00> : vector<8x128xf32>
    %25 = tpu.matmul %21, %24, %cst_33 {dimension_numbers = #tpu.dot_dimension_numbers<[1], [0], [0], [1], [0, 0, 1, 1], [], []>} : vector<8x72xf32>, vector<72x128xf32>, vector<8x128xf32> -> vector<8x128xf32>
    %26 = arith.addf %22, %25 : vector<8x128xf32>
    %c0_34 = arith.constant 0 : index
    %c0_35 = arith.constant 0 : index
    %27 = vector.load %arg6[%c0_34, %c0_35] : memref<8x128xf32, #tpu.memory_space<vmem>>, vector<8x128xf32>
    tpu.vector_store %arg6[%c0_34, %c0_35], %26 {strides = array<i32>} : memref<8x128xf32, #tpu.memory_space<vmem>>, vector<8x128xf32>,
    %c0_36 = arith.constant 0 : index
    %c0_37 = arith.constant 0 : index
    %28 = vector.load %arg6[%c0_36, %c0_37] : memref<8x128xf32, #tpu.memory_space<vmem>>, vector<8x128xf32>
    %cst_38 = arith.constant 0.000000e+00 : f32
    %29 = vector.broadcast %cst_38 : f32 to vector<8x128xf32>
    %30 = arith.cmpf oge, %28, %29 : vector<8x128xf32>
    %cst_39 = arith.constant 2.000000e-01 : f32
    %31 = vector.broadcast %cst_39 : f32 to vector<8x128xf32>
    %32 = arith.mulf %31, %28 : vector<8x128xf32>
    %33 = arith.select %30, %28, %32 : vector<8x128xi1>, vector<8x128xf32>
    %34 = vector.shape_cast %33 : vector<8x128xf32> to vector<1x8x128xf32>
    %c0_40 = arith.constant 0 : index
    %c0_41 = arith.constant 0 : index
    %c0_42 = arith.constant 0 : index
    %35 = vector.load %arg5[%c0_40, %c0_41, %c0_42] : memref<1x8x128xf32, #tpu.memory_space<vmem>>, vector<1x8x128xf32>
    tpu.vector_store %arg5[%c0_40, %c0_41, %c0_42], %34 {strides = array<i32>} : memref<1x8x128xf32, #tpu.memory_space<vmem>>, vector<1x8x128xf32>,
    return
  }
  func.func @transform_0(%arg0: i32, %arg1: i32) -> (i32, i32, i32, i32) {
    %c0_i32 = arith.constant 0 : i32
    %c0_i32_0 = arith.constant 0 : i32
    %c0_i32_1 = arith.constant 0 : i32
    return %arg0, %arg1, %c0_i32, %c0_i32_0 : i32, i32, i32, i32
  }
  func.func @transform_1(%arg0: i32, %arg1: i32) -> (i32, i32, i32) {
    %c0_i32 = arith.constant 0 : i32
    %c0_i32_0 = arith.constant 0 : i32
    %c0_i32_1 = arith.constant 0 : i32
    %c0_i32_2 = arith.constant 0 : i32
    return %c0_i32, %c0_i32_0, %c0_i32_1 : i32, i32, i32
  }
  func.func @transform_2(%arg0: i32, %arg1: i32) -> (i32, i32) {
    %c0_i32 = arith.constant 0 : i32
    %c0_i32_0 = arith.constant 0 : i32
    %c0_i32_1 = arith.constant 0 : i32
    return %c0_i32, %c0_i32_0 : i32, i32
  }
  func.func @transform_3(%arg0: i32, %arg1: i32) -> (i32, i32, i32) {
    %c0_i32 = arith.constant 0 : i32
    %c0_i32_0 = arith.constant 0 : i32
    return %arg0, %arg1, %c0_i32 : i32, i32, i32
  }
}

</mosaic_0001>

<llo_original>
// kernel: tile.8
$region0: #{tile.8}
  #allocation0 [shape = 's32[1]{0}', space=sflag, size = 0x4, scoped, tag = 'scoped memory for tile.8']
  %s0 = inlined_call_operand.vmem [shape: f32[8], index: 0, kind: input, shape index: {}]
  %s1 = inlined_call_operand.vmem [shape: f32[16,8], index: 1, kind: output, shape index: {}]
  // Predicated region
  $region2: #{tile.8} parent=0 // pred_check
    _
  $region3: #{tile.8} parent=0 // pred_check_branch
    %3 = sbr.rel (0) target = $region5
  $region4: #{tile.8} parent=0 // pred_region
    _
  $region5: #{tile.8} parent=0 // pred_fallthru
    _
  %v4 = vld [vmem:[%s0] ss:$0 sm:$0xff]
  %5 = vst [vmem:[%s1] sm:$0xff] %v4
  %s6 = scalar_lea.vmem %s1, 8
  %7 = vst [vmem:[%s6] sm:$0xff] %v4

// kernel: tile.9
$region0: #{tile.9}
  %s0 = inlined_call_operand.vmem [shape: f32[16,8], index: 0, kind: input, shape index: {}]
  %s1 = inlined_call_operand.vmem [shape: f32[1,128], index: 1, kind: output, shape index: {}]
  $region1: #{tile.9} parent=0
    #allocation0 [shape = 'u8[4096]{0}', space=vmem, size = 0x1000, scoped, tag = 'scoped mem for output reshape']
    %v2 = vld [vmem:[%s0] sm:$0x1]
    %vm3 = vcmask 64512
    %4 = vst.msk [vmem:[#allocation0] sm:$0x1] %vm3, %v2
    %s5 = scalar_lea.vmem %s0, 15
    %v6 = vld [vmem:[%s5] sm:$0x1]
    %7 = vrot.lane.b32.xlu0 %v6, 120
    %v8 = vpop.permute.xlu0 %7
    %vm9 = vcmask 1048512
    %10 = vst.msk [vmem:[#allocation0] sm:$0x1] %vm9, %v8
    %s11 = scalar_lea.vmem %s0, 14
    %v12 = vld [vmem:[%s11] sm:$0x1]
    %13 = vrot.lane.b32.xlu0 %v12, 112
    %v14 = vpop.permute.xlu0 %13
    %vm15 = vcmask 982912
    %16 = vst.msk [vmem:[#allocation0] sm:$0x1] %vm15, %v14
    %s17 = scalar_lea.vmem %s0, 13
    %v18 = vld [vmem:[%s17] sm:$0x1]
    %19 = vrot.lane.b32.xlu0 %v18, 104
    %v20 = vpop.permute.xlu0 %19
    %vm21 = vcmask 917312
    %22 = vst.msk [vmem:[#allocation0] sm:$0x1] %vm21, %v20
    %s23 = scalar_lea.vmem %s0, 12
    %v24 = vld [vmem:[%s23] sm:$0x1]
    %25 = vrot.lane.b32.xlu0 %v24, 96
    %v26 = vpop.permute.xlu0 %25
    %vm27 = vcmask 851712
    %28 = vst.msk [vmem:[#allocation0] sm:$0x1] %vm27, %v26
    %s29 = scalar_lea.vmem %s0, 11
    %v30 = vld [vmem:[%s29] sm:$0x1]
    %31 = vrot.lane.b32.xlu0 %v30, 88
    %v32 = vpop.permute.xlu0 %31
    %vm33 = vcmask 786112
    %34 = vst.msk [vmem:[#allocation0] sm:$0x1] %vm33, %v32
    %s35 = scalar_lea.vmem %s0, 10
    %v36 = vld [vmem:[%s35] sm:$0x1]
    %37 = vrot.lane.b32.xlu0 %v36, 80
    %v38 = vpop.permute.xlu0 %37
    %vm39 = vcmask 720512
    %40 = vst.msk [vmem:[#allocation0] sm:$0x1] %vm39, %v38
    %s41 = scalar_lea.vmem %s0, 9
    %v42 = vld [vmem:[%s41] sm:$0x1]
    %43 = vrot.lane.b32.xlu0 %v42, 72
    %v44 = vpop.permute.xlu0 %43
    %vm45 = vcmask 654912
    %46 = vst.msk [vmem:[#allocation0] sm:$0x1] %vm45, %v44
    %s47 = scalar_lea.vmem %s0, 8
    %v48 = vld [vmem:[%s47] sm:$0x1]
    %49 = vrot.lane.b32.xlu0 %v48, 64
    %v50 = vpop.permute.xlu0 %49
    %vm51 = vcmask 589312
    %52 = vst.msk [vmem:[#allocation0] sm:$0x1] %vm51, %v50
    %s53 = scalar_lea.vmem %s0, 7
    %v54 = vld [vmem:[%s53] sm:$0x1]
    %55 = vrot.lane.b32.xlu0 %v54, 56
    %v56 = vpop.permute.xlu0 %55
    %vm57 = vcmask 523712
    %58 = vst.msk [vmem:[#allocation0] sm:$0x1] %vm57, %v56
    %s59 = scalar_lea.vmem %s0, 6
    %v60 = vld [vmem:[%s59] sm:$0x1]
    %61 = vrot.lane.b32.xlu0 %v60, 48
    %v62 = vpop.permute.xlu0 %61
    %vm63 = vcmask 458112
    %64 = vst.msk [vmem:[#allocation0] sm:$0x1] %vm63, %v62
    %s65 = scalar_lea.vmem %s0, 5
    %v66 = vld [vmem:[%s65] sm:$0x1]
    %67 = vrot.lane.b32.xlu0 %v66, 40
    %v68 = vpop.permute.xlu0 %67
    %vm69 = vcmask 392512
    %70 = vst.msk [vmem:[#allocation0] sm:$0x1] %vm69, %v68
    %s71 = scalar_lea.vmem %s0, 4
    %v72 = vld [vmem:[%s71] sm:$0x1]
    %73 = vrot.lane.b32.xlu0 %v72, 32
    %v74 = vpop.permute.xlu0 %73
    %vm75 = vcmask 326912
    %76 = vst.msk [vmem:[#allocation0] sm:$0x1] %vm75, %v74
    %s77 = scalar_lea.vmem %s0, 3
    %v78 = vld [vmem:[%s77] sm:$0x1]
    %79 = vrot.lane.b32.xlu0 %v78, 24
    %v80 = vpop.permute.xlu0 %79
    %vm81 = vcmask 261312
    %82 = vst.msk [vmem:[#allocation0] sm:$0x1] %vm81, %v80
    %s83 = scalar_lea.vmem %s0, 2
    %v84 = vld [vmem:[%s83] sm:$0x1]
    %85 = vrot.lane.b32.xlu0 %v84, 16
    %v86 = vpop.permute.xlu0 %85
    %vm87 = vcmask 195712
    %88 = vst.msk [vmem:[#allocation0] sm:$0x1] %vm87, %v86
    %s89 = scalar_lea.vmem %s0, 1
    %v90 = vld [vmem:[%s89] sm:$0x1]
    %91 = vrot.lane.b32.xlu0 %v90, 8
    %v92 = vpop.permute.xlu0 %91
    %vm93 = vcmask 130112
    %94 = vst.msk [vmem:[#allocation0] sm:$0x1] %vm93, %v92
    %s96 = sshllo.u32 0, 1
    %v98 = vld [vmem:[#allocation0] sm:%s96]
    %s99 = sshllo.u32 0, 1
    %100 = vst [vmem:[%s1] sm:%s99] %v98

// kernel: block_forward.1
$region0: #{block_forward.1}
  #allocation0 [shape = 'u32[]', space=smem, size = 0x4, offset = 0x4, fixed_abs, tag = 'smem constant byte address 0x4 - core index']
  #allocation1 [shape = 'u32[144,128]{1,0:T(1,128)}', space=vmem, size = 0x12000, scoped, tag = 'internal scratch']
  #allocation2 [shape = 'f32[8,128]{1,0:T(8,128)}', space=vmem, size = 0x1000, scoped, tag = 'scratch operand']
  %s0 = inlined_call_operand.vmem [shape: f32[2,2,10,72], index: 0, kind: input, shape index: {}]
  %s1 = inlined_call_operand.vmem [shape: f32[3,72,128], index: 1, kind: input, shape index: {}]
  %s2 = inlined_call_operand.vmem [shape: f32[1,128], index: 2, kind: input, shape index: {}]
  %s3 = inlined_call_operand.vmem [shape: f32[2,16,128], index: 3, kind: output, shape index: {}]
  %s4 = sld [smem:[#allocation0]]
  $region45: #{block_forward.1} parent=0
    _
  %s6 = ssub.s32 1, %s4
  %s7 = scalar_select 0, %s6, %s4
  loop: start=0, step=1, limit=6
  $region2: #{block_forward.1} parent=0 // loop_pre_header
    _
  $region3: #{block_forward.1} parent=0 // loop_header
    %s9 = sphi 0, %s13
    %p10 = scmp.ge.s32.totalorder %s9, 6
    %s16 = sphi 0, %s28
    %s17 = sphi 0, %s24
    %s18 = sphi 0, %s16
    %s19 = sphi 0, %s17
    %s20 = sphi 0, %s18
    %s21 = sphi 0, %s19
    %s33 = sphi 0, %s35
    %s36 = sphi 0, %s33
    %s37 = sphi 0, %s36
    %s53 = sphi 0, %s37
    %s57 = sphi 0, %s57
    %s59 = sphi 0, %s57
    %s60 = sphi 0, %s59
    %s74 = sphi 0, %s60
    %s78 = sphi 0, %s78
    %s80 = sphi 0, %s78
    %s81 = sphi 0, %s80
    %s95 = sphi 0, %s81
    %s103 = sphi 0, %s105
    %s106 = sphi 0, %s103
    %s107 = sphi 0, %s106
    %s123 = sphi 0, %s107
  $region4: #{block_forward.1} parent=0 // loop_header_branch
    %12 = sbr.rel (%p10) target = $region8
  $region5: #{block_forward.1} parent=0 // loop_body
    %s14 = ssub.s32 %s9, 1
    %s15 = ssub.s32 %s9, 2
    %s22 = sadd.s32 1, %s17
    %p23 = scmp.ge.s32.totalorder %s22, 2
    %s24 = scalar_select %p23, 0, %s22
    %s25 = sadd.s32 1, %s16
    %s26 = scalar_select %p23, %s25, %s16
    %p27 = scmp.ge.s32.totalorder %s26, 2
    %s28 = scalar_select %p27, 0, %s26
    %s29 = ssub.s32 %s16, %s28
    %s30 = ssub.s32 %s17, %s24
    %s31 = sor.u32 %s29, %s30
    %p32 = scmp.eq.s32.totalorder %s31, 0
    %s34 = sadd.s32 %s33, 1
    %s35 = scalar_select %p32, %s33, %s34
    %p38 = pneg %p32
    %p39 = scmp.eq.s32.totalorder %s9, 3
    %p40 = por %p38, %p39
    %p41 = scmp.ne.s32.totalorder %s33, %s36
    %p42 = scmp.eq.s32.totalorder %s9, 0
    %p43 = por %p41, %p42
    %p44 = scmp.ne.s32.totalorder %s33, %s36
    %p45 = scmp.eq.s32.totalorder %s14, 3
    %p46 = por %p44, %p45
    %p47 = scmp.ne.s32.totalorder %s36, %s37
    %p48 = scmp.eq.s32.totalorder %s14, 0
    %p49 = por %p47, %p48
    %p50 = scmp.ne.s32.totalorder %s36, %s37
    %p51 = scmp.eq.s32.totalorder %s15, 3
    %p52 = por %p50, %p51
    %p54 = scmp.ne.s32.totalorder %s37, %s53
    %p55 = scmp.eq.s32.totalorder %s15, 0
    %p56 = por %p54, %p55
    %s58 = sadd.s32 %s57, 1
    %p61 = scmp.eq.s32.totalorder %s9, 3
    %p62 = scmp.ne.s32.totalorder %s57, %s59
    %p63 = scmp.eq.s32.totalorder %s9, 0
    %p64 = por %p62, %p63
    %p65 = scmp.ne.s32.totalorder %s57, %s59
    %p66 = scmp.eq.s32.totalorder %s14, 3
    %p67 = por %p65, %p66
    %p68 = scmp.ne.s32.totalorder %s59, %s60
    %p69 = scmp.eq.s32.totalorder %s14, 0
    %p70 = por %p68, %p69
    %p71 = scmp.ne.s32.totalorder %s59, %s60
    %p72 = scmp.eq.s32.totalorder %s15, 3
    %p73 = por %p71, %p72
    %p75 = scmp.ne.s32.totalorder %s60, %s74
    %p76 = scmp.eq.s32.totalorder %s15, 0
    %p77 = por %p75, %p76
    %s79 = sadd.s32 %s78, 1
    %p82 = scmp.eq.s32.totalorder %s9, 3
    %p83 = scmp.ne.s32.totalorder %s78, %s80
    %p84 = scmp.eq.s32.totalorder %s9, 0
    %p85 = por %p83, %p84
    %p86 = scmp.ne.s32.totalorder %s78, %s80
    %p87 = scmp.eq.s32.totalorder %s14, 3
    %p88 = por %p86, %p87
    %p89 = scmp.ne.s32.totalorder %s80, %s81
    %p90 = scmp.eq.s32.totalorder %s14, 0
    %p91 = por %p89, %p90
    %p92 = scmp.ne.s32.totalorder %s80, %s81
    %p93 = scmp.eq.s32.totalorder %s15, 3
    %p94 = por %p92, %p93
    %p96 = scmp.ne.s32.totalorder %s81, %s95
    %p97 = scmp.eq.s32.totalorder %s15, 0
    %p98 = por %p96, %p97
    %s99 = ssub.s32 %s16, %s28
    %s100 = ssub.s32 %s17, %s24
    %s101 = sor.u32 %s99, %s100
    %p102 = scmp.eq.s32.totalorder %s101, 0
    %s104 = sadd.s32 %s103, 1
    %s105 = scalar_select %p102, %s103, %s104
    %p108 = pneg %p102
    %p109 = scmp.eq.s32.totalorder %s9, 3
    %p110 = por %p108, %p109
    %p111 = scmp.ne.s32.totalorder %s103, %s106
    %p112 = scmp.eq.s32.totalorder %s9, 0
    %p113 = por %p111, %p112
    %p114 = scmp.ne.s32.totalorder %s103, %s106
    %p115 = scmp.eq.s32.totalorder %s14, 3
    %p116 = por %p114, %p115
    %p117 = scmp.ne.s32.totalorder %s106, %s107
    %p118 = scmp.eq.s32.totalorder %s14, 0
    %p119 = por %p117, %p118
    %p120 = scmp.ne.s32.totalorder %s106, %s107
    %p121 = scmp.eq.s32.totalorder %s15, 3
    %p122 = por %p120, %p121
    %p124 = scmp.ne.s32.totalorder %s107, %s123
    %p125 = scmp.eq.s32.totalorder %s15, 0
    %p126 = por %p124, %p125
    %p127 = scmp.le.s32.totalorder 1, %s9
    %p128 = scmp.lt.s32.totalorder %s9, 5
    %p129 = pnand %p127, %p128
    %p130 = pneg %p129
    // Predicated region
    $region9: #{block_forward.1} parent=5 // pred_check
      _
    $region10: #{block_forward.1} parent=5 // pred_check_branch
      %132 = sbr.rel (%p129) target = $region12
    $region11: #{block_forward.1} parent=5 // pred_region
      %s133 = ssub.s32 %s9, 1
      // Predicated region
      $region13: #{block_forward.1} parent=11 // pred_check
        %p134 = pneg %p70
      $region14: #{block_forward.1} parent=11 // pred_check_branch
        %136 = sbr.rel (%p134) target = $region16
      $region15: #{block_forward.1} parent=11 // pred_region
        _
      $region16: #{block_forward.1} parent=11 // pred_fallthru
        _
      // Predicated region
      $region17: #{block_forward.1} parent=11 // pred_check
        %p137 = pneg %p91
      $region18: #{block_forward.1} parent=11 // pred_check_branch
        %139 = sbr.rel (%p137) target = $region20
      $region19: #{block_forward.1} parent=11 // pred_region
        _
      $region20: #{block_forward.1} parent=11 // pred_fallthru
        _
    $region12: #{block_forward.1} parent=5 // pred_fallthru
      _
    %p140 = scmp.lt.s32.totalorder %s9, 4
    // Predicated region
    $region21: #{block_forward.1} parent=5 // pred_check
      %p141 = pneg %p140
    $region22: #{block_forward.1} parent=5 // pred_check_branch
      %143 = sbr.rel (%p141) target = $region24
    $region23: #{block_forward.1} parent=5 // pred_region
      // Predicated region
      $region25: #{block_forward.1} parent=23 // pred_check
        %p144 = pneg %p43
      $region26: #{block_forward.1} parent=23 // pred_check_branch
        %146 = sbr.rel (%p144) target = $region28
      $region27: #{block_forward.1} parent=23 // pred_region
        %p147 = scmp.lt.s32.totalorder %s16, 1
        %s148 = scalar_select %p147, %s16, 1
        %p149 = scmp.lt.s32.totalorder %s17, 1
        %s150 = scalar_select %p149, %s17, 1
        %s151 = smul.addr %s150, 2
        %s152 = smul.addr %s148, 4
        %s153 = sadd.s32 %s151, %s152
        %s154 = smul.addr %s153, 8
        %s155 = scalar_lea.vmem %s0, %s154
      $region28: #{block_forward.1} parent=23 // pred_fallthru
        _
    $region24: #{block_forward.1} parent=5 // pred_fallthru
      _
    %p156 = scmp.le.s32.totalorder 1, %s9
    %p157 = scmp.lt.s32.totalorder %s9, 5
    %p158 = pnand %p156, %p157
    %p159 = pneg %p158
    // Predicated region
    $region29: #{block_forward.1} parent=5 // pred_check
      _
    $region30: #{block_forward.1} parent=5 // pred_check_branch
      %161 = sbr.rel (%p158) target = $region32
    $region31: #{block_forward.1} parent=5 // pred_region
      %s162 = ssub.s32 %s9, 1
      %p163 = scmp.lt.s32.totalorder %s18, 1
      %s164 = scalar_select %p163, %s18, 1
      %p165 = scmp.lt.s32.totalorder %s19, 1
      %s166 = scalar_select %p165, %s19, 1
      %s167 = smul.addr %s166, 2
      %s168 = smul.addr %s164, 4
      %s169 = sadd.s32 %s167, %s168
      %s170 = smul.addr %s169, 8
      %s171 = scalar_lea.vmem %s0, %s170
      %p172 = pneg %p49
      %p173 = pneg %p46
      %p174 = pneg %p70
      %p175 = pneg %p67
      %p176 = pneg %p91
      %p177 = pneg %p88
      %p178 = pneg %p119
      %p179 = pneg %p116
      %p180 = scmp.lt.s32.totalorder %s18, 1
      %s181 = scalar_select %p180, %s18, 1
      %p182 = scmp.lt.s32.totalorder %s19, 1
      %s183 = scalar_select %p182, %s19, 1
      %s184 = smul.addr %s181, 2
      %s185 = sadd.s32 %s183, %s184
      %s186 = smul.addr %s185, 8
      %s187 = scalar_lea.vmem %s3, %s186
      %p188 = scmp.lt.s32.totalorder %s18, 1
      %s189 = scalar_select %p188, %s18, 1
      %p190 = scmp.lt.s32.totalorder %s19, 1
      %s191 = scalar_select %p190, %s19, 1
      %s192 = smul.addr %s191, 2
      %s193 = smul.addr %s189, 4
      %s194 = sadd.s32 %s192, %s193
      %s195 = smul.addr %s194, 8
      %s196 = scalar_lea.vmem %s0, %s195
      %p197 = scmp.lt.s32.totalorder %s18, 1
      %s198 = scalar_select %p197, %s18, 1
      %p199 = scmp.lt.s32.totalorder %s19, 1
      %s200 = scalar_select %p199, %s19, 1
      %s201 = smul.addr %s198, 2
      %s202 = sadd.s32 %s200, %s201
      %s203 = smul.addr %s202, 8
      %s204 = scalar_lea.vmem %s3, %s203
      %v205 = vld [vmem:[%s2] sm:$0x1]
      %v207 = vlaneseq
      %v208 = vshrl.u32 %v207, 7
      %v209 = vsub.s32 0, %v208
      %v210 = vrot.slane %v205, %v209
      %212 = vst [vmem:[#allocation2] sm:$0xff] %v210
      %v213 = vld [vmem:[%s196] sm:$0xff]
      %v214 = vld [vmem:[#allocation2] sm:$0xff]
      %v215 = vld [vmem:[%s1] sm:$0xff]
      %v216 = vld [vmem:[%s1 + $0x8] sm:$0xff]
      %v217 = vld [vmem:[%s1 + $0x10] sm:$0xff]
      %v218 = vld [vmem:[%s1 + $0x18] sm:$0xff]
      %v219 = vld [vmem:[%s1 + $0x20] sm:$0xff]
      %v220 = vld [vmem:[%s1 + $0x28] sm:$0xff]
      %v221 = vld [vmem:[%s1 + $0x30] sm:$0xff]
      %v222 = vld [vmem:[%s1 + $0x38] sm:$0xff]
      %v223 = vld [vmem:[%s1 + $0x40] sm:$0xff]
      %vm224 = vcmask 588800
      %v226 = vsel %vm224, %v213, 0
      %228 = vmatprep.subr.mxu0 0.0
      %229 = vmatpush1.msra.mxu0 %v215
      %230 = vmatprep.subr.mxu0 0.0
      %231 = vmatpush1.msra.mxu0 %v216
      %232 = vmatprep.subr.mxu0 0.0
      %233 = vmatpush1.msra.mxu0 %v217
      %234 = vmatprep.subr.mxu0 0.0
      %235 = vmatpush1.msra.mxu0 %v218
      %236 = vmatprep.subr.mxu0 0.0
      %237 = vmatpush1.msra.mxu0 %v219
      %238 = vmatprep.subr.mxu0 0.0
      %239 = vmatpush1.msra.mxu0 %v220
      %240 = vmatprep.subr.mxu0 0.0
      %241 = vmatpush1.msra.mxu0 %v221
      %242 = vmatprep.subr.mxu0 0.0
      %243 = vmatpush1.msra.mxu0 %v222
      %244 = vmatprep.subr.mxu0 0.0
      %245 = vmatpush1.msra.mxu0 %v223
      %246 = vmatprep.subr.mxu0 0.0
      %247 = vmatpush1.msra.mxu0 0.0
      %248 = vmatprep.subr.mxu0 0.0
      %249 = vmatpush1.msra.mxu0 0.0
      %250 = vmatprep.subr.mxu0 0.0
      %251 = vmatpush1.msra.mxu0 0.0
      %252 = vmatprep.subr.mxu0 0.0
      %253 = vmatpush1.msra.mxu0 0.0
      %254 = vmatprep.subr.mxu0 0.0
      %255 = vmatpush1.msra.mxu0 0.0
      %256 = vmatprep.subr.mxu0 0.0
      %257 = vmatpush1.msra.mxu0 0.0
      %258 = vmatprep.subr.mxu0 0.0
      %259 = vmatpush1.msra.mxu0 0.0
      %260 = vmatprep.subr.mxu0 0.0
      %261 = vmatpush1.msra.mxu0 0.0
      %262 = vmatprep.subr.mxu0 0.0
      %263 = vmatpush1.msra.mxu0 0.0
      %264 = vmatprep.subr.mxu0 0.0
      %265 = vmatpush1.msra.mxu0 0.0
      %266 = vmatprep.subr.mxu0 0.0
      %267 = vmatpush1.msra.mxu0 0.0
      %268 = vmatprep.subr.mxu0 0.0
      %269 = vmatpush1.msra.mxu0 0.0
      %270 = vmatprep.subr.mxu0 0.0
      %271 = vmatpush1.msra.mxu0 0.0
      %272 = vmatprep.subr.mxu0 0.0
      %273 = vmatpush1.msra.mxu0 0.0
      %274 = vmatprep.subr.mxu0 0.0
      %275 = vmatpush1.msra.mxu0 0.0
      %276 = vmatprep.subr.mxu0 0.0
      %277 = vmatpush1.msra.mxu0 0.0
      %278 = vmatprep.subr.mxu0 0.0
      %279 = vmatpush1.msra.mxu0 0.0
      %280 = vmatprep.subr.mxu0 0.0
      %281 = vmatpush1.msra.mxu0 0.0
      %282 = vmatprep.subr.mxu0 0.0
      %283 = vmatpush1.msra.mxu0 0.0
      %284 = vmatprep.subr.mxu0 0.0
      %285 = vmatpush1.msra.mxu0 0.0
      %286 = vmatprep.subr.mxu0 0.0
      %287 = vmatpush1.msra.mxu0 0.0
      %288 = vmatprep.subr.mxu0 0.0
      %289 = vmatpush1.msra.mxu0 0.0
      %290 = vmatprep.subr.mxu0 0.0
      %291 = vmatpush1.msra.mxu0 0.0
      %292 = vmatprep.mubr.f32.mxu0 0.0
      %293 = vmatmul.mubr.f32.gmra.mrb[0].mxu0 %v226
      %v294 = vpop.f32.mrb[0].mxu0
      %v295 = vadd.f32 0.0, %v294
      %v296 = vpop.f32.mrb[0].mxu0
      %297 = vdwg.mxu0
      %v298 = vadd.f32 %v214, %v295
      %299 = vst [vmem:[#allocation2] sm:$0xff] %v298
      %v300 = vld [vmem:[%s196 + $0x1] sm:$0xff]
      %v301 = vld [vmem:[#allocation2] sm:$0xff]
      %s302 = scalar_lea.vmem %s1, 72
      %v303 = vld [vmem:[%s302] sm:$0xff]
      %v304 = vld [vmem:[%s302 + $0x8] sm:$0xff]
      %v305 = vld [vmem:[%s302 + $0x10] sm:$0xff]
      %v306 = vld [vmem:[%s302 + $0x18] sm:$0xff]
      %v307 = vld [vmem:[%s302 + $0x20] sm:$0xff]
      %v308 = vld [vmem:[%s302 + $0x28] sm:$0xff]
      %v309 = vld [vmem:[%s302 + $0x30] sm:$0xff]
      %v310 = vld [vmem:[%s302 + $0x38] sm:$0xff]
      %v311 = vld [vmem:[%s302 + $0x40] sm:$0xff]
      %v313 = vsel %vm224, %v300, 0
      %315 = vmatprep.subr.mxu0 0.0
      %316 = vmatpush1.msra.mxu0 %v303
      %317 = vmatprep.subr.mxu0 0.0
      %318 = vmatpush1.msra.mxu0 %v304
      %319 = vmatprep.subr.mxu0 0.0
      %320 = vmatpush1.msra.mxu0 %v305
      %321 = vmatprep.subr.mxu0 0.0
      %322 = vmatpush1.msra.mxu0 %v306
      %323 = vmatprep.subr.mxu0 0.0
      %324 = vmatpush1.msra.mxu0 %v307
      %325 = vmatprep.subr.mxu0 0.0
      %326 = vmatpush1.msra.mxu0 %v308
      %327 = vmatprep.subr.mxu0 0.0
      %328 = vmatpush1.msra.mxu0 %v309
      %329 = vmatprep.subr.mxu0 0.0
      %330 = vmatpush1.msra.mxu0 %v310
      %331 = vmatprep.subr.mxu0 0.0
      %332 = vmatpush1.msra.mxu0 %v311
      %333 = vmatprep.subr.mxu0 0.0
      %334 = vmatpush1.msra.mxu0 0.0
      %335 = vmatprep.subr.mxu0 0.0
      %336 = vmatpush1.msra.mxu0 0.0
      %337 = vmatprep.subr.mxu0 0.0
      %338 = vmatpush1.msra.mxu0 0.0
      %339 = vmatprep.subr.mxu0 0.0
      %340 = vmatpush1.msra.mxu0 0.0
      %341 = vmatprep.subr.mxu0 0.0
      %342 = vmatpush1.msra.mxu0 0.0
      %343 = vmatprep.subr.mxu0 0.0
      %344 = vmatpush1.msra.mxu0 0.0
      %345 = vmatprep.subr.mxu0 0.0
      %346 = vmatpush1.msra.mxu0 0.0
      %347 = vmatprep.subr.mxu0 0.0
      %348 = vmatpush1.msra.mxu0 0.0
      %349 = vmatprep.subr.mxu0 0.0
      %350 = vmatpush1.msra.mxu0 0.0
      %351 = vmatprep.subr.mxu0 0.0
      %352 = vmatpush1.msra.mxu0 0.0
      %353 = vmatprep.subr.mxu0 0.0
      %354 = vmatpush1.msra.mxu0 0.0
      %355 = vmatprep.subr.mxu0 0.0
      %356 = vmatpush1.msra.mxu0 0.0
      %357 = vmatprep.subr.mxu0 0.0
      %358 = vmatpush1.msra.mxu0 0.0
      %359 = vmatprep.subr.mxu0 0.0
      %360 = vmatpush1.msra.mxu0 0.0
      %361 = vmatprep.subr.mxu0 0.0
      %362 = vmatpush1.msra.mxu0 0.0
      %363 = vmatprep.subr.mxu0 0.0
      %364 = vmatpush1.msra.mxu0 0.0
      %365 = vmatprep.subr.mxu0 0.0
      %366 = vmatpush1.msra.mxu0 0.0
      %367 = vmatprep.subr.mxu0 0.0
      %368 = vmatpush1.msra.mxu0 0.0
      %369 = vmatprep.subr.mxu0 0.0
      %370 = vmatpush1.msra.mxu0 0.0
      %371 = vmatprep.subr.mxu0 0.0
      %372 = vmatpush1.msra.mxu0 0.0
      %373 = vmatprep.subr.mxu0 0.0
      %374 = vmatpush1.msra.mxu0 0.0
      %375 = vmatprep.subr.mxu0 0.0
      %376 = vmatpush1.msra.mxu0 0.0
      %377 = vmatprep.subr.mxu0 0.0
      %378 = vmatpush1.msra.mxu0 0.0
      %379 = vmatprep.mubr.f32.mxu0 0.0
      %380 = vmatmul.mubr.f32.gmra.mrb[0].mxu0 %v313
      %v381 = vpop.f32.mrb[0].mxu0
      %v382 = vadd.f32 0.0, %v381
      %v383 = vpop.f32.mrb[0].mxu0
      %384 = vdwg.mxu0
      %v385 = vadd.f32 %v301, %v382
      %386 = vst [vmem:[#allocation2] sm:$0xff] %v385
      %v387 = vld [vmem:[%s196 + $0x2] sm:$0xff]
      %v388 = vld [vmem:[#allocation2] sm:$0xff]
      %s389 = scalar_lea.vmem %s1, 144
      %v390 = vld [vmem:[%s389] sm:$0xff]
      %v391 = vld [vmem:[%s389 + $0x8] sm:$0xff]
      %v392 = vld [vmem:[%s389 + $0x10] sm:$0xff]
      %v393 = vld [vmem:[%s389 + $0x18] sm:$0xff]
      %v394 = vld [vmem:[%s389 + $0x20] sm:$0xff]
      %v395 = vld [vmem:[%s389 + $0x28] sm:$0xff]
      %v396 = vld [vmem:[%s389 + $0x30] sm:$0xff]
      %v397 = vld [vmem:[%s389 + $0x38] sm:$0xff]
      %v398 = vld [vmem:[%s389 + $0x40] sm:$0xff]
      %v400 = vsel %vm224, %v387, 0
      %402 = vmatprep.subr.mxu0 0.0
      %403 = vmatpush1.msra.mxu0 %v390
      %404 = vmatprep.subr.mxu0 0.0
      %405 = vmatpush1.msra.mxu0 %v391
      %406 = vmatprep.subr.mxu0 0.0
      %407 = vmatpush1.msra.mxu0 %v392
      %408 = vmatprep.subr.mxu0 0.0
      %409 = vmatpush1.msra.mxu0 %v393
      %410 = vmatprep.subr.mxu0 0.0
      %411 = vmatpush1.msra.mxu0 %v394
      %412 = vmatprep.subr.mxu0 0.0
      %413 = vmatpush1.msra.mxu0 %v395
      %414 = vmatprep.subr.mxu0 0.0
      %415 = vmatpush1.msra.mxu0 %v396
      %416 = vmatprep.subr.mxu0 0.0
      %417 = vmatpush1.msra.mxu0 %v397
      %418 = vmatprep.subr.mxu0 0.0
      %419 = vmatpush1.msra.mxu0 %v398
      %420 = vmatprep.subr.mxu0 0.0
      %421 = vmatpush1.msra.mxu0 0.0
      %422 = vmatprep.subr.mxu0 0.0
      %423 = vmatpush1.msra.mxu0 0.0
      %424 = vmatprep.subr.mxu0 0.0
      %425 = vmatpush1.msra.mxu0 0.0
      %426 = vmatprep.subr.mxu0 0.0
      %427 = vmatpush1.msra.mxu0 0.0
      %428 = vmatprep.subr.mxu0 0.0
      %429 = vmatpush1.msra.mxu0 0.0
      %430 = vmatprep.subr.mxu0 0.0
      %431 = vmatpush1.msra.mxu0 0.0
      %432 = vmatprep.subr.mxu0 0.0
      %433 = vmatpush1.msra.mxu0 0.0
      %434 = vmatprep.subr.mxu0 0.0
      %435 = vmatpush1.msra.mxu0 0.0
      %436 = vmatprep.subr.mxu0 0.0
      %437 = vmatpush1.msra.mxu0 0.0
      %438 = vmatprep.subr.mxu0 0.0
      %439 = vmatpush1.msra.mxu0 0.0
      %440 = vmatprep.subr.mxu0 0.0
      %441 = vmatpush1.msra.mxu0 0.0
      %442 = vmatprep.subr.mxu0 0.0
      %443 = vmatpush1.msra.mxu0 0.0
      %444 = vmatprep.subr.mxu0 0.0
      %445 = vmatpush1.msra.mxu0 0.0
      %446 = vmatprep.subr.mxu0 0.0
      %447 = vmatpush1.msra.mxu0 0.0
      %448 = vmatprep.subr.mxu0 0.0
      %449 = vmatpush1.msra.mxu0 0.0
      %450 = vmatprep.subr.mxu0 0.0
      %451 = vmatpush1.msra.mxu0 0.0
      %452 = vmatprep.subr.mxu0 0.0
      %453 = vmatpush1.msra.mxu0 0.0
      %454 = vmatprep.subr.mxu0 0.0
      %455 = vmatpush1.msra.mxu0 0.0
      %456 = vmatprep.subr.mxu0 0.0
      %457 = vmatpush1.msra.mxu0 0.0
      %458 = vmatprep.subr.mxu0 0.0
      %459 = vmatpush1.msra.mxu0 0.0
      %460 = vmatprep.subr.mxu0 0.0
      %461 = vmatpush1.msra.mxu0 0.0
      %462 = vmatprep.subr.mxu0 0.0
      %463 = vmatpush1.msra.mxu0 0.0
      %464 = vmatprep.subr.mxu0 0.0
      %465 = vmatpush1.msra.mxu0 0.0
      %466 = vmatprep.mubr.f32.mxu0 0.0
      %467 = vmatmul.mubr.f32.gmra.mrb[0].mxu0 %v400
      %v468 = vpop.f32.mrb[0].mxu0
      %v469 = vadd.f32 0.0, %v468
      %v470 = vpop.f32.mrb[0].mxu0
      %471 = vdwg.mxu0
      %v472 = vadd.f32 %v388, %v469
      %473 = vst [vmem:[#allocation2] sm:$0xff] %v472
      %v474 = vld [vmem:[#allocation2] sm:$0xff]
      %vm475 = vcmp.ge.f32.partialorder %v474, 0.0
      %v476 = vmul.f32 %v474, 0.2
      %v477 = vsel %vm475, %v474, %v476
      %478 = vst [vmem:[%s204] sm:$0xff] %v477
      %p479 = scmp.lt.s32.totalorder %s18, 1
      %s480 = scalar_select %p479, %s18, 1
      %p481 = scmp.lt.s32.totalorder %s19, 1
      %s482 = scalar_select %p481, %s19, 1
      %s483 = smul.addr %s480, 2
      %s484 = sadd.s32 %s482, %s483
      %s485 = smul.addr %s484, 8
      %s486 = scalar_lea.vmem %s3, %s485
      // Predicated region
      $region33: #{block_forward.1} parent=31 // pred_check
        %p487 = pneg %p116
      $region34: #{block_forward.1} parent=31 // pred_check_branch
        %489 = sbr.rel (%p487) target = $region36
      $region35: #{block_forward.1} parent=31 // pred_region
        _
      $region36: #{block_forward.1} parent=31 // pred_fallthru
        _
    $region32: #{block_forward.1} parent=5 // pred_fallthru
      _
    %p490 = scmp.le.s32.totalorder 2, %s9
    // Predicated region
    $region37: #{block_forward.1} parent=5 // pred_check
      %p491 = pneg %p490
    $region38: #{block_forward.1} parent=5 // pred_check_branch
      %493 = sbr.rel (%p491) target = $region40
    $region39: #{block_forward.1} parent=5 // pred_region
      %s494 = ssub.s32 %s9, 2
      // Predicated region
      $region41: #{block_forward.1} parent=39 // pred_check
        %p495 = pneg %p122
      $region42: #{block_forward.1} parent=39 // pred_check_branch
        %497 = sbr.rel (%p495) target = $region44
      $region43: #{block_forward.1} parent=39 // pred_region
        %p498 = scmp.lt.s32.totalorder %s20, 1
        %s499 = scalar_select %p498, %s20, 1
        %p500 = scmp.lt.s32.totalorder %s21, 1
        %s501 = scalar_select %p500, %s21, 1
        %s502 = smul.addr %s499, 2
        %s503 = sadd.s32 %s501, %s502
        %s504 = smul.addr %s503, 8
        %s505 = scalar_lea.vmem %s3, %s504
      $region44: #{block_forward.1} parent=39 // pred_fallthru
        _
    $region40: #{block_forward.1} parent=5 // pred_fallthru
      _
  $region6: #{block_forward.1} parent=0 // loop_footer
    %s13 = sadd.s32 1, %s9
  $region7: #{block_forward.1} parent=0 // loop_footer_branch
    %8 = sbr.rel target = $region3
  $region8: #{block_forward.1} parent=0 // loop_exit
    _

</llo_original>
